<compile_context>
chip_gen: v5e
topology: v5e:2x2
jax: 0.10.0
libtpu: 0.0.40
codegen_flags: <defaults>
</compile_context>

<pallas_src>
import jax
import jax.numpy as jnp
from jax.experimental import pallas as pl
from jax.experimental.pallas import tpu as pltpu


def _linear_add_kernel(x_ref, w_ref, o_ref):
    # x_ref: SMEM (2,) f32 = flattened x1
    # w_ref: SMEM (2,) f32 = `other` parameter
    # o_ref: SMEM (2,) f32
    x0 = x_ref[0]
    x1 = x_ref[1]
    w0 = w_ref[0]
    w1 = w_ref[1]
    # F.linear with a 1-D weight == inner product along the feature axis.
    v1 = x0 * w0 + x1 * w1
    # broadcast-add of the scalar result onto the weight vector
    o_ref[0] = v1 + w0
    o_ref[1] = v1 + w1


def make_model_forward(other: jax.Array):
    """Prepare the fixed parameter once; return a jitted per-call forward."""
    other_f32 = jnp.asarray(other, dtype=jnp.float32).reshape(2)

    call = pl.pallas_call(
        _linear_add_kernel,
        out_shape=jax.ShapeDtypeStruct((2,), jnp.float32),
        in_specs=[
            pl.BlockSpec(memory_space=pltpu.SMEM),  # x (2,)
            pl.BlockSpec(memory_space=pltpu.SMEM),  # other (2,)
        ],
        out_specs=pl.BlockSpec(memory_space=pltpu.SMEM),
        cost_estimate=pl.CostEstimate(flops=4, transcendentals=0,
                                      bytes_accessed=24),
    )

    @jax.jit
    def forward(x1: jax.Array) -> jax.Array:
        # x1: (1, 2) -> flatten to 1-D (avoids 2-D SMEM padding).
        x_flat = x1.reshape(-1).astype(jnp.float32)
        return call(x_flat, other_f32)

    return forward


if __name__ == "__main__":
    key = jax.random.PRNGKey(0)
    k_other, k_x = jax.random.split(key)
    other = jax.random.normal(k_other, (2,), dtype=jnp.float32)   # parameter
    x1 = jax.random.normal(k_x, (1, 2), dtype=jnp.float32)        # input

    forward = make_model_forward(other)
    out = forward(x1)
    jax.block_until_ready(out)

    # Reference in plain JAX (same semantics as the PyTorch model):
    #   F.linear(x1, other) -> (1,), then (1,) + (2,) broadcasts to (2,).
    ref = (jnp.dot(x1, other) + other).reshape(2)
    assert out.shape == (2,), out.shape
    assert jnp.allclose(out, ref, atol=1e-6), (out, ref)

    print("KERNEL_OK")
</pallas_src>

<mosaic_0001>
module attributes {stable_mosaic.version = 11 : i64} {
  func.func @_linear_add_kernel(%arg0: memref<2xf32, #tpu.memory_space<smem>>, %arg1: memref<2xf32, #tpu.memory_space<smem>>, %arg2: memref<2xf32, #tpu.memory_space<smem>>) attributes {dimension_semantics = [], scalar_prefetch = 0 : i64, scratch_operands = 0 : i64, tpu.core_type = #tpu.core_type<tc>} {
    %c0 = arith.constant 0 : index
    %0 = memref.load %arg0[%c0] : memref<2xf32, #tpu.memory_space<smem>>
    %c1 = arith.constant 1 : index
    %1 = memref.load %arg0[%c1] : memref<2xf32, #tpu.memory_space<smem>>
    %c0_0 = arith.constant 0 : index
    %2 = memref.load %arg1[%c0_0] : memref<2xf32, #tpu.memory_space<smem>>
    %c1_1 = arith.constant 1 : index
    %3 = memref.load %arg1[%c1_1] : memref<2xf32, #tpu.memory_space<smem>>
    %4 = arith.mulf %0, %2 : f32
    %5 = arith.mulf %1, %3 : f32
    %6 = arith.addf %4, %5 : f32
    %7 = arith.addf %6, %2 : f32
    %c0_2 = arith.constant 0 : index
    %8 = memref.load %arg2[%c0_2] : memref<2xf32, #tpu.memory_space<smem>>
    memref.store %7, %arg2[%c0_2] : memref<2xf32, #tpu.memory_space<smem>>
    %9 = arith.addf %6, %3 : f32
    %c1_3 = arith.constant 1 : index
    %10 = memref.load %arg2[%c1_3] : memref<2xf32, #tpu.memory_space<smem>>
    memref.store %9, %arg2[%c1_3] : memref<2xf32, #tpu.memory_space<smem>>
    return
  }
}

</mosaic_0001>

<llo_original>
// kernel: forward.1
$region0: #{forward.1}
  #allocation0 [shape = 'u32[]', space=smem, size = 0x4, offset = 0x4, fixed_abs, tag = 'smem constant byte address 0x4 - core index']
  #allocation1 [shape = 'u32[72,128]{1,0:T(1,128)}', space=vmem, size = 0x9000, scoped, tag = 'internal scratch']
  %s0 = inlined_call_operand.hbm [shape: f32[2], index: 0, kind: input, shape index: {}]
  %s1 = inlined_call_operand.vmem [shape: f32[2], index: 1, kind: input, shape index: {}]
  %s2 = inlined_call_operand.hbm [shape: f32[2], index: 2, kind: output, shape index: {}]
  %s3 = sld [smem:[#allocation0]]
  $region26: #{forward.1} parent=0
    _
  %s5 = ssub.s32 1, %s3
  %s6 = scalar_select 0, %s5, %s3
  $region1: #{forward.1} parent=0
    #allocation2 [shape = 'u8[512]{0}', space=smem, size = 0x200, scoped, tag = 'input window, operand 0, single buffered']
    #allocation3 [shape = 's32[1]{0}', space=sflag, size = 0x4, scoped, tag = 'scoped memory for forward.1']
    #allocation4 [shape = 's32[1]{0}', space=sflag, size = 0x4, scoped, tag = 'scoped memory for forward.1']
    #allocation5 [shape = 's32[1]{0}', space=sflag, size = 0x4, scoped, tag = 'scoped memory for forward.1']
    #allocation6 [shape = 'u8[512]{0}', space=smem, size = 0x200, scoped, tag = 'input window, operand 1, single buffered']
    #allocation7 [shape = 'u8[512]{0}', space=smem, size = 0x200, scoped, tag = 'output window, operand 0, single buffered']
    %7 = vsyncpa [#allocation3], 0
    %8 = vsyncpa [#allocation5], 0
    %9 = vsyncpa [#allocation4], 0
    // Predicated region
    $region2: #{forward.1} parent=1 // pred_check
      _
    $region3: #{forward.1} parent=1 // pred_check_branch
      %11 = sbr.rel (0) target = $region5
    $region4: #{forward.1} parent=1 // pred_region
      %13 = vsyncadd [#allocation3], 0
      %s15 = sshll.u32 %s0, 4
      %s16 = int_to_ptr.hbm [resolvable:$true] %s15
      %18 = dma.hbm_to_smem %s16, 16, [#allocation2], [#allocation3]
    $region5: #{forward.1} parent=1 // pred_fallthru
      _
    // Predicated region
    $region6: #{forward.1} parent=1 // pred_check
      _
    $region7: #{forward.1} parent=1 // pred_check_branch
      %20 = sbr.rel (0) target = $region9
    $region8: #{forward.1} parent=1 // pred_region
      %22 = vsyncadd [#allocation5], 0
      %s24 = sshll.u32 %s1, 4
      %s25 = int_to_ptr.vmem [resolvable:$true] %s24
      %27 = dma.vmem_to_smem %s25, 16, [#allocation6], [#allocation5]
    $region9: #{forward.1} parent=1 // pred_fallthru
      _
    // Predicated region
    $region10: #{forward.1} parent=1 // pred_check
      _
    $region11: #{forward.1} parent=1 // pred_check_branch
      %29 = sbr.rel (0) target = $region13
    $region12: #{forward.1} parent=1 // pred_region
      %31 = dma.done [#allocation3], 16
    $region13: #{forward.1} parent=1 // pred_fallthru
      _
    // Predicated region
    $region14: #{forward.1} parent=1 // pred_check
      _
    $region15: #{forward.1} parent=1 // pred_check_branch
      %33 = sbr.rel (0) target = $region17
    $region16: #{forward.1} parent=1 // pred_region
      %35 = dma.done [#allocation5], 16
    $region17: #{forward.1} parent=1 // pred_fallthru
      _
    %36 = sfence
    %s37 = sld [smem:[#allocation2]]
    %s38 = sld [smem:[#allocation2 + $0x1]]
    %s39 = sld [smem:[#allocation6]]
    %s40 = sld [smem:[#allocation6 + $0x1]]
    %s41 = smul.f32 %s37, %s39
    %s42 = smul.f32 %s38, %s40
    %s43 = sadd.f32 %s41, %s42
    %s44 = sadd.f32 %s43, %s39
    %s45 = scalar_lea.smem [#allocation7], 0
    %46 = sst [smem:[%s45]] %s44
    %s47 = sadd.f32 %s43, %s40
    %s48 = scalar_lea.smem [#allocation7], 1
    %49 = sst [smem:[%s48]] %s47
    // Predicated region
    $region18: #{forward.1} parent=1 // pred_check
      _
    $region19: #{forward.1} parent=1 // pred_check_branch
      %51 = sbr.rel (0) target = $region21
    $region20: #{forward.1} parent=1 // pred_region
      %53 = vsyncadd [#allocation4], 0
      %s55 = sshll.u32 %s2, 4
      %s56 = int_to_ptr.hbm [resolvable:$true] %s55
      %58 = dma.smem_to_hbm [#allocation7], 16, %s56, [#allocation4]
    $region21: #{forward.1} parent=1 // pred_fallthru
      _
    // Predicated region
    $region22: #{forward.1} parent=1 // pred_check
      _
    $region23: #{forward.1} parent=1 // pred_check_branch
      %60 = sbr.rel (0) target = $region25
    $region24: #{forward.1} parent=1 // pred_region
      %62 = dma.done [#allocation4], 16
    $region25: #{forward.1} parent=1 // pred_fallthru
      _
    %63 = sfence
    %64 = vsyncpa [#allocation3], 1
    %65 = vsyncpa [#allocation4], 1
    %66 = vsyncpa [#allocation5], 1

</llo_original>
